<compile_context>
chip_gen: v6e
topology: v6e:2x2x1
jax: 0.10.0
libtpu: 0.0.40
codegen_flags: <defaults>
</compile_context>

<pallas_src>
import functools

import jax
import jax.numpy as jnp
from jax.experimental import pallas as pl
from jax.experimental.pallas import tpu as pltpu

_LANE = 128


def _round_up(v, m):
    return ((v + m - 1) // m) * m


def _actor_kernel(x_ref, *refs, matmul_dtype):
    """Fused MLP trunk (+ReLU) + head + softmax for one batch tile.

    refs = (w0, b0, w1, b1, ..., wL, bL, out_ref).  Weights are (in, out) and
    already cast to matmul_dtype; biases are f32, and the head's padded action
    lanes are pre-set to -1e30, which bakes the softmax lane mask into the
    bias (no iota/compare/select needed here).
    """
    out_ref = refs[-1]
    wb = refs[:-1]
    n_lin = len(wb) // 2

    h = x_ref[...]  # f32 activations
    for i in range(n_lin):
        w = wb[2 * i][...]
        b = wb[2 * i + 1][...]
        # MXU matmul in matmul_dtype (bf16 by default), f32 accumulate.
        h = jnp.dot(h.astype(matmul_dtype), w,
                    preferred_element_type=jnp.float32) + b
        if i < n_lin - 1:  # trunk layers get ReLU, the head does not
            h = jnp.maximum(h, 0.0)

    # Numerically stable softmax in f32.  Padded logit lanes equal -1e30 via
    # the head bias, so they exp to exactly 0 and contribute nothing.
    m = jnp.max(h, axis=-1, keepdims=True)
    e = jnp.exp(h - m)
    out_ref[...] = (e / jnp.sum(e, axis=-1, keepdims=True)).astype(out_ref.dtype)


def _pad_actor_params(params, matmul_dtype, lane=_LANE, neg_inf=-1e30):
    """Pad output dims to lane multiples; cast W to matmul_dtype (once, in JAX).

    The first layer's input dim is left unpadded (x keeps its natural feature
    width).  Every layer's output dim is padded to a multiple of 128 with zero
    weight columns.  Trunk bias padding is 0 (ReLU(0)=0 keeps padded hidden
    lanes at zero); the head's bias padding is -1e30 (softmax mask).
    """
    padded = []
    n_layers = len(params)
    for li, (w, b) in enumerate(params):
        din, dout = w.shape
        dinp = din if li == 0 else _round_up(din, lane)
        doutp = _round_up(dout, lane)
        wp = jnp.zeros((dinp, doutp), matmul_dtype).at[:din, :dout].set(
            w.astype(matmul_dtype))
        bias_fill = neg_inf if li == n_layers - 1 else 0.0
        bp = jnp.full((1, doutp), bias_fill, jnp.float32).at[:, :dout].set(
            b.reshape(1, -1).astype(jnp.float32))
        padded.append((wp, bp))
    return padded


def sac_actor_states(x, params, *, tile_m=None, matmul_dtype=jnp.bfloat16,
                     trim_output=True):
    """Equivalent of SACActorStates.forward (is_discrete=True): returns probs.

    params: list of (W(in,out), b(1,out)) pairs — trunk linears then the head.
    """
    M, K = x.shape
    n_actions = params[-1][0].shape[1]

    padded = _pad_actor_params(params, matmul_dtype)
    n_pad = padded[-1][0].shape[1]

    # Batch tiling: single tile only for truly tiny batches; mid-size batches
    # get >=2 grid steps ("parallel" axis -> both v7x TensorCores busy);
    # large batches use 512-row tiles (amortizes ~0.35us/step, ~85% of HBM
    # roofline on v6e vs ~63% at 256).
    if tile_m is None:
        if M <= 64:
            tile_m = _round_up(M, 16)
        elif M <= 1024:
            tile_m = _round_up(pl.cdiv(M, 2), 16)
        else:
            tile_m = 512
    m_pad = _round_up(M, tile_m)

    xp = x if m_pad == M else jnp.zeros((m_pad, K), x.dtype).at[:M, :].set(x)

    flat = []
    for w, b in padded:
        flat.extend([w, b])

    # VMEM budget: resident weights (single-buffered) + double-buffered x/out
    # tiles + a few f32 activation temps; x2 margin, capped at v7x-safe 64 MiB.
    wb_bytes = sum(int(w.size) * w.dtype.itemsize + int(b.size) * b.dtype.itemsize
                   for w, b in padded)
    widest = max(int(w.shape[1]) for w, _ in padded)
    tile_bytes = 2 * tile_m * (K + n_pad) * x.dtype.itemsize
    act_bytes = 4 * tile_m * widest * 4
    vmem_limit = int(min(max(2 * (wb_bytes + tile_bytes + act_bytes), 32 << 20),
                         64 << 20))

    def _call(weight_pipeline_mode):
        wkw = {} if weight_pipeline_mode is None else dict(
            pipeline_mode=weight_pipeline_mode)
        in_specs = [pl.BlockSpec((tile_m, K), lambda i: (i, 0))]
        for w, b in padded:
            # Weights/biases: full tensor, constant block index -> resident.
            in_specs.append(pl.BlockSpec(w.shape, lambda i: (0, 0), **wkw))
            in_specs.append(pl.BlockSpec(b.shape, lambda i: (0, 0), **wkw))
        return pl.pallas_call(
            functools.partial(_actor_kernel, matmul_dtype=matmul_dtype),
            out_shape=jax.ShapeDtypeStruct((m_pad, n_pad), x.dtype),
            grid_spec=pltpu.PrefetchScalarGridSpec(
                num_scalar_prefetch=0,
                grid=(m_pad // tile_m,),
                in_specs=in_specs,
                out_specs=pl.BlockSpec((tile_m, n_pad), lambda i: (i, 0)),
            ),
            compiler_params=pltpu.CompilerParams(
                dimension_semantics=("parallel",),
                vmem_limit_bytes=vmem_limit,
            ),
        )(xp, *flat)

    try:
        # Constant-index blocks never change across grid steps -> a single
        # VMEM buffer suffices (halves resident-weight VMEM; key on v7x).
        out = _call(pl.Buffered(1))
    except Exception:
        # Fallback for Pallas versions that reject buffer_count=1: default
        # double-buffering (correct, just more VMEM).
        out = _call(None)

    if not trim_output:
        return out  # (m_pad, 128) lane-dense probs; padded lanes are exactly 0
    return out[:M, :n_actions]


def init_actor_params(key, state_shape, num_layers, num_hidden, action_shape):
    """Deterministic synthetic init (uniform +-1/sqrt(fan_in), nn.Linear-like)."""
    dims = [state_shape] + [num_hidden] * num_layers + [action_shape]
    params = []
    for i in range(len(dims) - 1):
        key, kw, kb = jax.random.split(key, 3)
        scale = 1.0 / float(dims[i]) ** 0.5
        w = jax.random.uniform(kw, (dims[i], dims[i + 1]), jnp.float32, -scale, scale)
        b = jax.random.uniform(kb, (1, dims[i + 1]), jnp.float32, -scale, scale)
        params.append((w, b))
    return params


def _actor_ref(x, params, matmul_dtype=jnp.float32):
    """Pure-JAX reference: trunk+ReLU, head, softmax.

    Matmuls in matmul_dtype with f32 accumulate, element-wise in f32 —
    mirrors the kernel's numerics so bf16 runs can be compared tightly.
    """
    h = x
    n = len(params)
    for i, (w, b) in enumerate(params):
        h = jnp.dot(h.astype(matmul_dtype), w.astype(matmul_dtype),
                    preferred_element_type=jnp.float32) + b.reshape(1, -1)
        if i < n - 1:
            h = jnp.maximum(h, 0.0)
    return jax.nn.softmax(h, axis=-1)


if __name__ == "__main__":
    # Small shapes consistent with the module.
    batch, state_shape, num_layers, num_hidden, action_shape = 16, 16, 2, 32, 4

    key = jax.random.PRNGKey(0)
    kx, kp = jax.random.split(key)
    x = jax.random.normal(kx, (batch, state_shape), jnp.float32)
    params = init_actor_params(kp, state_shape, num_layers, num_hidden, action_shape)

    # Default path: bf16 MXU matmuls, f32 accumulate + softmax.
    probs = jax.block_until_ready(sac_actor_states(x, params))
    assert probs.shape == (batch, action_shape)
    assert jnp.allclose(jnp.sum(probs, axis=-1), 1.0, atol=1e-5)
    ref_bf16 = _actor_ref(x, params, jnp.bfloat16)
    assert jnp.allclose(probs, ref_bf16, atol=1e-3)
    ref_f32 = _actor_ref(x, params, jnp.float32)
    assert jnp.allclose(probs, ref_f32, atol=3e-2)

    # Full-f32 path (tight check against the f32 reference).
    probs32 = jax.block_until_ready(
        sac_actor_states(x, params, matmul_dtype=jnp.float32))
    assert probs32.shape == (batch, action_shape)
    assert jnp.allclose(probs32, ref_f32, atol=1e-5, rtol=1e-5)

    print("KERNEL_OK")
</pallas_src>

<mosaic_0001>
module attributes {stable_mosaic.version = 11 : i64} {
  func.func @_actor_kernel(%arg0: i32, %arg1: memref<16x16xf32, #tpu.memory_space<vmem>>, %arg2: memref<16x128xbf16, #tpu.memory_space<vmem>>, %arg3: memref<1x128xf32, #tpu.memory_space<vmem>>, %arg4: memref<128x128xbf16, #tpu.memory_space<vmem>>, %arg5: memref<1x128xf32, #tpu.memory_space<vmem>>, %arg6: memref<128x128xbf16, #tpu.memory_space<vmem>>, %arg7: memref<1x128xf32, #tpu.memory_space<vmem>>, %arg8: memref<16x128xf32, #tpu.memory_space<vmem>>) attributes {dimension_semantics = [#tpu.dimension_semantics<parallel>], iteration_bounds = array<i64: 1>, scalar_prefetch = 0 : i64, scratch_operands = 0 : i64, tpu.core_type = #tpu.core_type<tc>, window_params = [{transform_indices = @transform_0, window_bounds = array<i64: 16, 16>}, {pipeline_mode = #tpu.pipeline_mode<synchronous>, transform_indices = @transform_1, window_bounds = array<i64: 16, 128>}, {pipeline_mode = #tpu.pipeline_mode<synchronous>, transform_indices = @transform_2, window_bounds = array<i64: 1, 128>}, {pipeline_mode = #tpu.pipeline_mode<synchronous>, transform_indices = @transform_3, window_bounds = array<i64: 128, 128>}, {pipeline_mode = #tpu.pipeline_mode<synchronous>, transform_indices = @transform_4, window_bounds = array<i64: 1, 128>}, {pipeline_mode = #tpu.pipeline_mode<synchronous>, transform_indices = @transform_5, window_bounds = array<i64: 128, 128>}, {pipeline_mode = #tpu.pipeline_mode<synchronous>, transform_indices = @transform_6, window_bounds = array<i64: 1, 128>}, {transform_indices = @transform_7, window_bounds = array<i64: 16, 128>}]} {
    %c0 = arith.constant 0 : index
    %c0_0 = arith.constant 0 : index
    %0 = vector.load %arg1[%c0, %c0_0] : memref<16x16xf32, #tpu.memory_space<vmem>>, vector<16x16xf32>
    %c0_1 = arith.constant 0 : index
    %c0_2 = arith.constant 0 : index
    %1 = vector.load %arg2[%c0_1, %c0_2] : memref<16x128xbf16, #tpu.memory_space<vmem>>, vector<16x128xbf16>
    %c0_3 = arith.constant 0 : index
    %c0_4 = arith.constant 0 : index
    %2 = vector.load %arg3[%c0_3, %c0_4] : memref<1x128xf32, #tpu.memory_space<vmem>>, vector<1x128xf32>
    %3 = arith.truncf %0 : vector<16x16xf32> to vector<16x16xbf16>
    %cst = arith.constant dense<0.000000e+00> : vector<16x128xf32>
    %4 = tpu.matmul %3, %1, %cst {dimension_numbers = #tpu.dot_dimension_numbers<[1], [0], [0], [1], [0, 0, 1, 1], [], []>} : vector<16x16xbf16>, vector<16x128xbf16>, vector<16x128xf32> -> vector<16x128xf32>
    %5 = vector.broadcast %2 : vector<1x128xf32> to vector<16x128xf32>
    %6 = arith.addf %4, %5 : vector<16x128xf32>
    %cst_5 = arith.constant 0.000000e+00 : f32
    %7 = vector.broadcast %cst_5 : f32 to vector<16x128xf32>
    %8 = arith.maximumf %6, %7 : vector<16x128xf32>
    %c0_6 = arith.constant 0 : index
    %c0_7 = arith.constant 0 : index
    %9 = vector.load %arg4[%c0_6, %c0_7] : memref<128x128xbf16, #tpu.memory_space<vmem>>, vector<128x128xbf16>
    %c0_8 = arith.constant 0 : index
    %c0_9 = arith.constant 0 : index
    %10 = vector.load %arg5[%c0_8, %c0_9] : memref<1x128xf32, #tpu.memory_space<vmem>>, vector<1x128xf32>
    %11 = arith.truncf %8 : vector<16x128xf32> to vector<16x128xbf16>
    %cst_10 = arith.constant dense<0.000000e+00> : vector<16x128xf32>
    %12 = tpu.matmul %11, %9, %cst_10 {dimension_numbers = #tpu.dot_dimension_numbers<[1], [0], [0], [1], [0, 0, 1, 1], [], []>} : vector<16x128xbf16>, vector<128x128xbf16>, vector<16x128xf32> -> vector<16x128xf32>
    %13 = vector.broadcast %10 : vector<1x128xf32> to vector<16x128xf32>
    %14 = arith.addf %12, %13 : vector<16x128xf32>
    %cst_11 = arith.constant 0.000000e+00 : f32
    %15 = vector.broadcast %cst_11 : f32 to vector<16x128xf32>
    %16 = arith.maximumf %14, %15 : vector<16x128xf32>
    %c0_12 = arith.constant 0 : index
    %c0_13 = arith.constant 0 : index
    %17 = vector.load %arg6[%c0_12, %c0_13] : memref<128x128xbf16, #tpu.memory_space<vmem>>, vector<128x128xbf16>
    %c0_14 = arith.constant 0 : index
    %c0_15 = arith.constant 0 : index
    %18 = vector.load %arg7[%c0_14, %c0_15] : memref<1x128xf32, #tpu.memory_space<vmem>>, vector<1x128xf32>
    %19 = arith.truncf %16 : vector<16x128xf32> to vector<16x128xbf16>
    %cst_16 = arith.constant dense<0.000000e+00> : vector<16x128xf32>
    %20 = tpu.matmul %19, %17, %cst_16 {dimension_numbers = #tpu.dot_dimension_numbers<[1], [0], [0], [1], [0, 0, 1, 1], [], []>} : vector<16x128xbf16>, vector<128x128xbf16>, vector<16x128xf32> -> vector<16x128xf32>
    %21 = vector.broadcast %18 : vector<1x128xf32> to vector<16x128xf32>
    %22 = arith.addf %20, %21 : vector<16x128xf32>
    %cst_17 = arith.constant dense<0xFF800000> : vector<16xf32>
    %23 = vector.multi_reduction <maximumf>, %22, %cst_17 [1] : vector<16x128xf32> to vector<16xf32>
    %24 = vector.shape_cast %23 : vector<16xf32> to vector<16x1xf32>
    %25 = vector.broadcast %24 : vector<16x1xf32> to vector<16x128xf32>
    %26 = arith.subf %22, %25 : vector<16x128xf32>
    %27 = math.exp %26 : vector<16x128xf32>
    %cst_18 = arith.constant dense<0.000000e+00> : vector<16xf32>
    %28 = vector.multi_reduction <add>, %27, %cst_18 [1] : vector<16x128xf32> to vector<16xf32>
    %29 = vector.shape_cast %28 : vector<16xf32> to vector<16x1xf32>
    %30 = vector.broadcast %29 : vector<16x1xf32> to vector<16x128xf32>
    %31 = arith.divf %27, %30 : vector<16x128xf32>
    %c0_19 = arith.constant 0 : index
    %c0_20 = arith.constant 0 : index
    %32 = vector.load %arg8[%c0_19, %c0_20] : memref<16x128xf32, #tpu.memory_space<vmem>>, vector<16x128xf32>
    tpu.vector_store %arg8[%c0_19, %c0_20], %31 {strides = array<i32>} : memref<16x128xf32, #tpu.memory_space<vmem>>, vector<16x128xf32>,
    return
  }
  func.func @transform_0(%arg0: i32) -> (i32, i32) {
    %c0_i32 = arith.constant 0 : i32
    %c0_i32_0 = arith.constant 0 : i32
    return %arg0, %c0_i32 : i32, i32
  }
  func.func @transform_1(%arg0: i32) -> (i32, i32) {
    %c0_i32 = arith.constant 0 : i32
    %c0_i32_0 = arith.constant 0 : i32
    %c0_i32_1 = arith.constant 0 : i32
    return %c0_i32, %c0_i32_0 : i32, i32
  }
  func.func @transform_2(%arg0: i32) -> (i32, i32) {
    %c0_i32 = arith.constant 0 : i32
    %c0_i32_0 = arith.constant 0 : i32
    %c0_i32_1 = arith.constant 0 : i32
    return %c0_i32, %c0_i32_0 : i32, i32
  }
  func.func @transform_3(%arg0: i32) -> (i32, i32) {
    %c0_i32 = arith.constant 0 : i32
    %c0_i32_0 = arith.constant 0 : i32
    %c0_i32_1 = arith.constant 0 : i32
    return %c0_i32, %c0_i32_0 : i32, i32
  }
  func.func @transform_4(%arg0: i32) -> (i32, i32) {
    %c0_i32 = arith.constant 0 : i32
    %c0_i32_0 = arith.constant 0 : i32
    %c0_i32_1 = arith.constant 0 : i32
    return %c0_i32, %c0_i32_0 : i32, i32
  }
  func.func @transform_5(%arg0: i32) -> (i32, i32) {
    %c0_i32 = arith.constant 0 : i32
    %c0_i32_0 = arith.constant 0 : i32
    %c0_i32_1 = arith.constant 0 : i32
    return %c0_i32, %c0_i32_0 : i32, i32
  }
  func.func @transform_6(%arg0: i32) -> (i32, i32) {
    %c0_i32 = arith.constant 0 : i32
    %c0_i32_0 = arith.constant 0 : i32
    %c0_i32_1 = arith.constant 0 : i32
    return %c0_i32, %c0_i32_0 : i32, i32
  }
  func.func @transform_7(%arg0: i32) -> (i32, i32) {
    %c0_i32 = arith.constant 0 : i32
    %c0_i32_0 = arith.constant 0 : i32
    return %arg0, %c0_i32 : i32, i32
  }
}

module attributes {stable_mosaic.version = 11 : i64} {
  func.func @_actor_kernel(%arg0: i32, %arg1: memref<16x16xf32, #tpu.memory_space<vmem>>, %arg2: memref<16x128xbf16, #tpu.memory_space<vmem>>, %arg3: memref<1x128xf32, #tpu.memory_space<vmem>>, %arg4: memref<128x128xbf16, #tpu.memory_space<vmem>>, %arg5: memref<1x128xf32, #tpu.memory_space<vmem>>, %arg6: memref<128x128xbf16, #tpu.memory_space<vmem>>, %arg7: memref<1x128xf32, #tpu.memory_space<vmem>>, %arg8: memref<16x128xf32, #tpu.memory_space<vmem>>) attributes {dimension_semantics = [#tpu.dimension_semantics<parallel>], iteration_bounds = array<i64: 1>, scalar_prefetch = 0 : i64, scratch_operands = 0 : i64, tpu.core_type = #tpu.core_type<tc>, window_params = [{transform_indices = @transform_0, window_bounds = array<i64: 16, 16>}, {pipeline_mode = #tpu.pipeline_mode<synchronous>, transform_indices = @transform_1, window_bounds = array<i64: 16, 128>}, {pipeline_mode = #tpu.pipeline_mode<synchronous>, transform_indices = @transform_2, window_bounds = array<i64: 1, 128>}, {pipeline_mode = #tpu.pipeline_mode<synchronous>, transform_indices = @transform_3, window_bounds = array<i64: 128, 128>}, {pipeline_mode = #tpu.pipeline_mode<synchronous>, transform_indices = @transform_4, window_bounds = array<i64: 1, 128>}, {pipeline_mode = #tpu.pipeline_mode<synchronous>, transform_indices = @transform_5, window_bounds = array<i64: 128, 128>}, {pipeline_mode = #tpu.pipeline_mode<synchronous>, transform_indices = @transform_6, window_bounds = array<i64: 1, 128>}, {transform_indices = @transform_7, window_bounds = array<i64: 16, 128>}]} {
    %c0 = arith.constant 0 : index
    %c0_0 = arith.constant 0 : index
    %0 = vector.load %arg1[%c0, %c0_0] : memref<16x16xf32, #tpu.memory_space<vmem>>, vector<16x16xf32>
    %c0_1 = arith.constant 0 : index
    %c0_2 = arith.constant 0 : index
    %1 = vector.load %arg2[%c0_1, %c0_2] : memref<16x128xbf16, #tpu.memory_space<vmem>>, vector<16x128xbf16>
    %c0_3 = arith.constant 0 : index
    %c0_4 = arith.constant 0 : index
    %2 = vector.load %arg3[%c0_3, %c0_4] : memref<1x128xf32, #tpu.memory_space<vmem>>, vector<1x128xf32>
    %3 = arith.truncf %0 : vector<16x16xf32> to vector<16x16xbf16>
    %cst = arith.constant dense<0.000000e+00> : vector<16x128xf32>
    %4 = tpu.matmul %3, %1, %cst {dimension_numbers = #tpu.dot_dimension_numbers<[1], [0], [0], [1], [0, 0, 1, 1], [], []>} : vector<16x16xbf16>, vector<16x128xbf16>, vector<16x128xf32> -> vector<16x128xf32>
    %5 = vector.broadcast %2 : vector<1x128xf32> to vector<16x128xf32>
    %6 = arith.addf %4, %5 : vector<16x128xf32>
    %cst_5 = arith.constant 0.000000e+00 : f32
    %7 = vector.broadcast %cst_5 : f32 to vector<16x128xf32>
    %8 = arith.maximumf %6, %7 : vector<16x128xf32>
    %c0_6 = arith.constant 0 : index
    %c0_7 = arith.constant 0 : index
    %9 = vector.load %arg4[%c0_6, %c0_7] : memref<128x128xbf16, #tpu.memory_space<vmem>>, vector<128x128xbf16>
    %c0_8 = arith.constant 0 : index
    %c0_9 = arith.constant 0 : index
    %10 = vector.load %arg5[%c0_8, %c0_9] : memref<1x128xf32, #tpu.memory_space<vmem>>, vector<1x128xf32>
    %11 = arith.truncf %8 : vector<16x128xf32> to vector<16x128xbf16>
    %cst_10 = arith.constant dense<0.000000e+00> : vector<16x128xf32>
    %12 = tpu.matmul %11, %9, %cst_10 {dimension_numbers = #tpu.dot_dimension_numbers<[1], [0], [0], [1], [0, 0, 1, 1], [], []>} : vector<16x128xbf16>, vector<128x128xbf16>, vector<16x128xf32> -> vector<16x128xf32>
    %13 = vector.broadcast %10 : vector<1x128xf32> to vector<16x128xf32>
    %14 = arith.addf %12, %13 : vector<16x128xf32>
    %cst_11 = arith.constant 0.000000e+00 : f32
    %15 = vector.broadcast %cst_11 : f32 to vector<16x128xf32>
    %16 = arith.maximumf %14, %15 : vector<16x128xf32>
    %c0_12 = arith.constant 0 : index
    %c0_13 = arith.constant 0 : index
    %17 = vector.load %arg6[%c0_12, %c0_13] : memref<128x128xbf16, #tpu.memory_space<vmem>>, vector<128x128xbf16>
    %c0_14 = arith.constant 0 : index
    %c0_15 = arith.constant 0 : index
    %18 = vector.load %arg7[%c0_14, %c0_15] : memref<1x128xf32, #tpu.memory_space<vmem>>, vector<1x128xf32>
    %19 = arith.truncf %16 : vector<16x128xf32> to vector<16x128xbf16>
    %cst_16 = arith.constant dense<0.000000e+00> : vector<16x128xf32>
    %20 = tpu.matmul %19, %17, %cst_16 {dimension_numbers = #tpu.dot_dimension_numbers<[1], [0], [0], [1], [0, 0, 1, 1], [], []>} : vector<16x128xbf16>, vector<128x128xbf16>, vector<16x128xf32> -> vector<16x128xf32>
    %21 = vector.broadcast %18 : vector<1x128xf32> to vector<16x128xf32>
    %22 = arith.addf %20, %21 : vector<16x128xf32>
    %cst_17 = arith.constant dense<0xFF800000> : vector<16xf32>
    %23 = vector.multi_reduction <maximumf>, %22, %cst_17 [1] : vector<16x128xf32> to vector<16xf32>
    %24 = vector.shape_cast %23 : vector<16xf32> to vector<16x1xf32>
    %25 = vector.broadcast %24 : vector<16x1xf32> to vector<16x128xf32>
    %26 = arith.subf %22, %25 : vector<16x128xf32>
    %27 = math.exp %26 : vector<16x128xf32>
    %cst_18 = arith.constant dense<0.000000e+00> : vector<16xf32>
    %28 = vector.multi_reduction <add>, %27, %cst_18 [1] : vector<16x128xf32> to vector<16xf32>
    %29 = vector.shape_cast %28 : vector<16xf32> to vector<16x1xf32>
    %30 = vector.broadcast %29 : vector<16x1xf32> to vector<16x128xf32>
    %31 = arith.divf %27, %30 : vector<16x128xf32>
    %c0_19 = arith.constant 0 : index
    %c0_20 = arith.constant 0 : index
    %32 = vector.load %arg8[%c0_19, %c0_20] : memref<16x128xf32, #tpu.memory_space<vmem>>, vector<16x128xf32>
    tpu.vector_store %arg8[%c0_19, %c0_20], %31 {strides = array<i32>} : memref<16x128xf32, #tpu.memory_space<vmem>>, vector<16x128xf32>,
    return
  }
  func.func @transform_0(%arg0: i32) -> (i32, i32) {
    %c0_i32 = arith.constant 0 : i32
    %c0_i32_0 = arith.constant 0 : i32
    return %arg0, %c0_i32 : i32, i32
  }
  func.func @transform_1(%arg0: i32) -> (i32, i32) {
    %c0_i32 = arith.constant 0 : i32
    %c0_i32_0 = arith.constant 0 : i32
    %c0_i32_1 = arith.constant 0 : i32
    return %c0_i32, %c0_i32_0 : i32, i32
  }
  func.func @transform_2(%arg0: i32) -> (i32, i32) {
    %c0_i32 = arith.constant 0 : i32
    %c0_i32_0 = arith.constant 0 : i32
    %c0_i32_1 = arith.constant 0 : i32
    return %c0_i32, %c0_i32_0 : i32, i32
  }
  func.func @transform_3(%arg0: i32) -> (i32, i32) {
    %c0_i32 = arith.constant 0 : i32
    %c0_i32_0 = arith.constant 0 : i32
    %c0_i32_1 = arith.constant 0 : i32
    return %c0_i32, %c0_i32_0 : i32, i32
  }
  func.func @transform_4(%arg0: i32) -> (i32, i32) {
    %c0_i32 = arith.constant 0 : i32
    %c0_i32_0 = arith.constant 0 : i32
    %c0_i32_1 = arith.constant 0 : i32
    return %c0_i32, %c0_i32_0 : i32, i32
  }
  func.func @transform_5(%arg0: i32) -> (i32, i32) {
    %c0_i32 = arith.constant 0 : i32
    %c0_i32_0 = arith.constant 0 : i32
    %c0_i32_1 = arith.constant 0 : i32
    return %c0_i32, %c0_i32_0 : i32, i32
  }
  func.func @transform_6(%arg0: i32) -> (i32, i32) {
    %c0_i32 = arith.constant 0 : i32
    %c0_i32_0 = arith.constant 0 : i32
    %c0_i32_1 = arith.constant 0 : i32
    return %c0_i32, %c0_i32_0 : i32, i32
  }
  func.func @transform_7(%arg0: i32) -> (i32, i32) {
    %c0_i32 = arith.constant 0 : i32
    %c0_i32_0 = arith.constant 0 : i32
    return %arg0, %c0_i32 : i32, i32
  }
}

</mosaic_0001>

<llo_original>
// kernel: tpu_custom_call.1
$region0: #{tpu_custom_call.1}
  #allocation0 [shape = 'u32[]', space=smem, size = 0x4, offset = 0x4, fixed_abs, tag = 'smem constant byte address 0x4 - core index']
  #allocation1 [shape = 'u32[144,128]{1,0:T(1,128)}', space=vmem, size = 0x12000, scoped, tag = 'internal scratch']
  %s0 = inlined_call_operand.hbm [shape: f32[16,16], index: 0, kind: input, shape index: {}]
  %s1 = inlined_call_operand.hbm [shape: bf16[16,128], index: 1, kind: input, shape index: {}]
  %s2 = inlined_call_operand.vmem [shape: f32[1,128], index: 2, kind: input, shape index: {}]
  %s3 = inlined_call_operand.hbm [shape: bf16[128,128], index: 3, kind: input, shape index: {}]
  %s4 = inlined_call_operand.vmem [shape: f32[1,128], index: 4, kind: input, shape index: {}]
  %s5 = inlined_call_operand.hbm [shape: bf16[128,128], index: 5, kind: input, shape index: {}]
  %s6 = inlined_call_operand.vmem [shape: f32[1,128], index: 6, kind: input, shape index: {}]
  %s7 = inlined_call_operand.hbm [shape: f32[16,128], index: 7, kind: output, shape index: {}]
  %s8 = sld [smem:[#allocation0]]
  $region54: #{tpu_custom_call.1} parent=0
    _
  %s10 = ssub.s32 1, %s8
  %s11 = scalar_select 0, %s10, %s8
  $region1: #{tpu_custom_call.1} parent=0
    #allocation2 [shape = 'u8[8192]{0}', space=vmem, size = 0x2000, scoped, tag = 'input window, operand 0, single buffered']
    #allocation3 [shape = 's32[1]{0}', space=sflag, size = 0x4, scoped, tag = 'scoped memory for tpu_custom_call.1']
    #allocation4 [shape = 's32[1]{0}', space=sflag, size = 0x4, scoped, tag = 'scoped memory for tpu_custom_call.1']
    #allocation5 [shape = 'u8[4096]{0}', space=vmem, size = 0x1000, scoped, tag = 'input window, operand 1, single buffered']
    #allocation6 [shape = 's32[1]{0}', space=sflag, size = 0x4, scoped, tag = 'scoped memory for tpu_custom_call.1']
    #allocation7 [shape = 'u8[32768]{0}', space=vmem, size = 0x8000, scoped, tag = 'input window, operand 3, single buffered']
    #allocation8 [shape = 'u8[32768]{0}', space=vmem, size = 0x8000, scoped, tag = 'input window, operand 5, single buffered']
    #allocation9 [shape = 's32[1]{0}', space=sflag, size = 0x4, scoped, tag = 'scoped memory for tpu_custom_call.1']
    #allocation10 [shape = 'u8[8192]{0}', space=vmem, size = 0x2000, scoped, tag = 'output window, operand 0, single buffered']
    %12 = vsyncpa [#allocation3], 0
    %13 = vsyncpa [#allocation6], 0
    %14 = vsyncpa [#allocation9], 0
    %15 = vsyncpa [#allocation4], 0
    // Predicated region
    $region2: #{tpu_custom_call.1} parent=1 // pred_check
      _
    $region3: #{tpu_custom_call.1} parent=1 // pred_check_branch
      %17 = sbr.rel (0) target = $region5
    $region4: #{tpu_custom_call.1} parent=1 // pred_region
      %s19 = ssub.s32 256, 256
      %20 = vsyncadd [#allocation3], %s19
      %s21 = sshll.u32 [#allocation2], 4
      %s22 = int_to_ptr.vmem [resolvable:$true] %s21
      %27 = dma.hbm_to_vmem [thread:$0]  %s0, 256, %s22, [#allocation3], 128, 128, 8
    $region5: #{tpu_custom_call.1} parent=1 // pred_fallthru
      _
    // Predicated region
    $region6: #{tpu_custom_call.1} parent=1 // pred_check
      _
    $region7: #{tpu_custom_call.1} parent=1 // pred_check_branch
      %29 = sbr.rel (0) target = $region9
    $region8: #{tpu_custom_call.1} parent=1 // pred_region
      %s31 = ssub.s32 128, 128
      %32 = vsyncadd [#allocation6], %s31
      %s33 = sshll.u32 [#allocation5], 4
      %s34 = int_to_ptr.vmem [resolvable:$true] %s33
      %39 = dma.hbm_to_vmem [thread:$0]  %s1, 128, %s34, [#allocation6], 64, 64, 4
    $region9: #{tpu_custom_call.1} parent=1 // pred_fallthru
      _
    // Predicated region
    $region10: #{tpu_custom_call.1} parent=1 // pred_check
      _
    $region11: #{tpu_custom_call.1} parent=1 // pred_check_branch
      %41 = sbr.rel (0) target = $region13
    $region12: #{tpu_custom_call.1} parent=1 // pred_region
      _
    $region13: #{tpu_custom_call.1} parent=1 // pred_fallthru
      _
    // Predicated region
    $region14: #{tpu_custom_call.1} parent=1 // pred_check
      _
    $region15: #{tpu_custom_call.1} parent=1 // pred_check_branch
      %43 = sbr.rel (0) target = $region17
    $region16: #{tpu_custom_call.1} parent=1 // pred_region
      %s45 = ssub.s32 1024, 1024
      %46 = vsyncadd [#allocation6], %s45
      %s47 = sshll.u32 [#allocation7], 4
      %s48 = int_to_ptr.vmem [resolvable:$true] %s47
      %53 = dma.hbm_to_vmem [thread:$0]  %s3, 1024, %s48, [#allocation6], 64, 64, 4
    $region17: #{tpu_custom_call.1} parent=1 // pred_fallthru
      _
    // Predicated region
    $region18: #{tpu_custom_call.1} parent=1 // pred_check
      _
    $region19: #{tpu_custom_call.1} parent=1 // pred_check_branch
      %55 = sbr.rel (0) target = $region21
    $region20: #{tpu_custom_call.1} parent=1 // pred_region
      _
    $region21: #{tpu_custom_call.1} parent=1 // pred_fallthru
      _
    // Predicated region
    $region22: #{tpu_custom_call.1} parent=1 // pred_check
      _
    $region23: #{tpu_custom_call.1} parent=1 // pred_check_branch
      %57 = sbr.rel (0) target = $region25
    $region24: #{tpu_custom_call.1} parent=1 // pred_region
      %s59 = ssub.s32 1024, 1024
      %60 = vsyncadd [#allocation9], %s59
      %s61 = sshll.u32 [#allocation8], 4
      %s62 = int_to_ptr.vmem [resolvable:$true] %s61
      %67 = dma.hbm_to_vmem [thread:$0]  %s5, 1024, %s62, [#allocation9], 64, 64, 4
    $region25: #{tpu_custom_call.1} parent=1 // pred_fallthru
      _
    // Predicated region
    $region26: #{tpu_custom_call.1} parent=1 // pred_check
      _
    $region27: #{tpu_custom_call.1} parent=1 // pred_check_branch
      %69 = sbr.rel (0) target = $region29
    $region28: #{tpu_custom_call.1} parent=1 // pred_region
      _
    $region29: #{tpu_custom_call.1} parent=1 // pred_fallthru
      _
    // Predicated region
    $region30: #{tpu_custom_call.1} parent=1 // pred_check
      _
    $region31: #{tpu_custom_call.1} parent=1 // pred_check_branch
      %71 = sbr.rel (0) target = $region33
    $region32: #{tpu_custom_call.1} parent=1 // pred_region
      %72 = dma.done [#allocation3], 256
    $region33: #{tpu_custom_call.1} parent=1 // pred_fallthru
      _
    // Predicated region
    $region34: #{tpu_custom_call.1} parent=1 // pred_check
      _
    $region35: #{tpu_custom_call.1} parent=1 // pred_check_branch
      %74 = sbr.rel (0) target = $region37
    $region36: #{tpu_custom_call.1} parent=1 // pred_region
      %75 = dma.done [#allocation6], 128
    $region37: #{tpu_custom_call.1} parent=1 // pred_fallthru
      _
    // Predicated region
    $region38: #{tpu_custom_call.1} parent=1 // pred_check
      _
    $region39: #{tpu_custom_call.1} parent=1 // pred_check_branch
      %77 = sbr.rel (0) target = $region41
    $region40: #{tpu_custom_call.1} parent=1 // pred_region
      %78 = dma.done [#allocation6], 1024
    $region41: #{tpu_custom_call.1} parent=1 // pred_fallthru
      _
    // Predicated region
    $region42: #{tpu_custom_call.1} parent=1 // pred_check
      _
    $region43: #{tpu_custom_call.1} parent=1 // pred_check_branch
      %80 = sbr.rel (0) target = $region45
    $region44: #{tpu_custom_call.1} parent=1 // pred_region
      %81 = dma.done [#allocation9], 1024
    $region45: #{tpu_custom_call.1} parent=1 // pred_fallthru
      _
    %v83 = vld [vmem:[#allocation2] sm:$0xff]
    %v84 = vld [vmem:[#allocation2 + $0x8] sm:$0xff]
    %v85 = vld [vmem:[#allocation5] sm:$0xf]
    %v86 = vld [vmem:[#allocation5 + $0x4] sm:$0xf]
    %v87 = vld [vmem:[%s2] sm:$0x1]
    %v88 = vpack.c.bf16 %v84, %v83
    %v90 = vlaneseq
    %v91 = vshrl.u32 %v90, 7
    %v92 = vsub.s32 0, %v91
    %v93 = vrot.slane %v87, %v92
    %v97 = vunpack.c.l.b16 %v85
    %v98 = vunpack.c.l.b16 %v86
    %v99 = vpack.c.b16 %v98, %v97
    %vm101 = vcmask 130048
    %v103 = vsel %vm101, %v88, 0
    %105 = vmatprep.subr.bf16.mxu0 0
    %106 = vmatpush1.bf16.msra.mxu0 0
    %107 = vmatprep.subr.bf16.mxu0 0
    %108 = vmatpush1.bf16.msra.mxu0 0
    %109 = vmatprep.subr.bf16.mxu0 0
    %110 = vmatpush1.bf16.msra.mxu0 0
    %111 = vmatprep.subr.bf16.mxu0 0
    %112 = vmatpush1.bf16.msra.mxu0 0
    %113 = vmatprep.subr.bf16.mxu0 0
    %114 = vmatpush1.bf16.msra.mxu0 0
    %115 = vmatprep.subr.bf16.mxu0 0
    %116 = vmatpush1.bf16.msra.mxu0 0
    %117 = vmatprep.subr.bf16.mxu0 0
    %118 = vmatpush1.bf16.msra.mxu0 0
    %119 = vmatprep.subr.bf16.mxu0 0
    %120 = vmatpush1.bf16.msra.mxu0 %v99
    %121 = vmatprep.subr.bf16.mxu0 0
    %122 = vmatpush2.bf16.msra.mxu0 0
    %123 = vmatprep.subr.bf16.mxu0 0
    %124 = vmatpush2.bf16.msra.mxu0 0
    %125 = vmatprep.subr.bf16.mxu0 0
    %126 = vmatpush2.bf16.msra.mxu0 0
    %127 = vmatprep.subr.bf16.mxu0 0
    %128 = vmatpush2.bf16.msra.mxu0 0
    %129 = vmatprep.subr.bf16.mxu0 0
    %130 = vmatpush2.bf16.msra.mxu0 0
    %131 = vmatprep.subr.bf16.mxu0 0
    %132 = vmatpush2.bf16.msra.mxu0 0
    %133 = vmatprep.subr.bf16.mxu0 0
    %134 = vmatpush2.bf16.msra.mxu0 0
    %135 = vmatprep.subr.bf16.mxu0 0
    %136 = vmatpush2.bf16.msra.mxu0 0
    %137 = vmatprep.mubr.bf16.mxu0 0
    %138 = vmatmul.mubr.bf16.gmra.mxu0 %v103
    %v139 = vpop.f32.mrf.mxu0
    %v140 = vadd.f32 %v93, %v139
    %v141 = vpop.f32.mrf.mxu0
    %v142 = vpop.f32.mrf.mxu0
    %v143 = vadd.f32 %v93, %v142
    %v144 = vpop.f32.mrf.mxu0
    %145 = vdwg.mxu0
    %v146 = vmax.f32 %v140, 0.0
    %v147 = vmax.f32 %v143, 0.0
    %v148 = vld [vmem:[#allocation7] sm:$0xf]
    %v149 = vld [vmem:[#allocation7 + $0x4] sm:$0xf]
    %v150 = vld [vmem:[#allocation7 + $0x8] sm:$0xf]
    %v151 = vld [vmem:[#allocation7 + $0xc] sm:$0xf]
    %v152 = vld [vmem:[#allocation7 + $0x10] sm:$0xf]
    %v153 = vld [vmem:[#allocation7 + $0x14] sm:$0xf]
    %v154 = vld [vmem:[#allocation7 + $0x18] sm:$0xf]
    %v155 = vld [vmem:[#allocation7 + $0x1c] sm:$0xf]
    %v156 = vld [vmem:[#allocation7 + $0x20] sm:$0xf]
    %v157 = vld [vmem:[#allocation7 + $0x24] sm:$0xf]
    %v158 = vld [vmem:[#allocation7 + $0x28] sm:$0xf]
    %v159 = vld [vmem:[#allocation7 + $0x2c] sm:$0xf]
    %v160 = vld [vmem:[#allocation7 + $0x30] sm:$0xf]
    %v161 = vld [vmem:[#allocation7 + $0x34] sm:$0xf]
    %v162 = vld [vmem:[#allocation7 + $0x38] sm:$0xf]
    %v163 = vld [vmem:[#allocation7 + $0x3c] sm:$0xf]
    %v164 = vld [vmem:[%s4] sm:$0x1]
    %v165 = vpack.c.bf16 %v147, %v146
    %v167 = vlaneseq
    %v168 = vshrl.u32 %v167, 7
    %v169 = vsub.s32 0, %v168
    %v170 = vrot.slane %v164, %v169
    %v188 = vunpack.c.l.b16 %v148
    %v189 = vunpack.c.l.b16 %v149
    %v190 = vunpack.c.l.b16 %v150
    %v191 = vunpack.c.l.b16 %v151
    %v192 = vunpack.c.l.b16 %v152
    %v193 = vunpack.c.l.b16 %v153
    %v194 = vunpack.c.l.b16 %v154
    %v195 = vunpack.c.l.b16 %v155
    %v196 = vunpack.c.l.b16 %v156
    %v197 = vunpack.c.l.b16 %v157
    %v198 = vunpack.c.l.b16 %v158
    %v199 = vunpack.c.l.b16 %v159
    %v200 = vunpack.c.l.b16 %v160
    %v201 = vunpack.c.l.b16 %v161
    %v202 = vunpack.c.l.b16 %v162
    %v203 = vunpack.c.l.b16 %v163
    %v204 = vpack.c.b16 %v189, %v188
    %v205 = vpack.c.b16 %v191, %v190
    %v206 = vpack.c.b16 %v193, %v192
    %v207 = vpack.c.b16 %v195, %v194
    %v208 = vpack.c.b16 %v197, %v196
    %v209 = vpack.c.b16 %v199, %v198
    %v210 = vpack.c.b16 %v201, %v200
    %v211 = vpack.c.b16 %v203, %v202
    %220 = vmatprep.subr.bf16.mxu0 0
    %221 = vmatpush1.bf16.msra.mxu0 %v211
    %222 = vmatprep.subr.bf16.mxu0 0
    %223 = vmatpush1.bf16.msra.mxu0 %v210
    %224 = vmatprep.subr.bf16.mxu0 0
    %225 = vmatpush1.bf16.msra.mxu0 %v209
    %226 = vmatprep.subr.bf16.mxu0 0
    %227 = vmatpush1.bf16.msra.mxu0 %v208
    %228 = vmatprep.subr.bf16.mxu0 0
    %229 = vmatpush1.bf16.msra.mxu0 %v207
    %230 = vmatprep.subr.bf16.mxu0 0
    %231 = vmatpush1.bf16.msra.mxu0 %v206
    %232 = vmatprep.subr.bf16.mxu0 0
    %233 = vmatpush1.bf16.msra.mxu0 %v205
    %234 = vmatprep.subr.bf16.mxu0 0
    %235 = vmatpush1.bf16.msra.mxu0 %v204
    %236 = vmatprep.subr.bf16.mxu0 0
    %237 = vmatpush2.bf16.msra.mxu0 0
    %238 = vmatprep.subr.bf16.mxu0 0
    %239 = vmatpush2.bf16.msra.mxu0 0
    %240 = vmatprep.subr.bf16.mxu0 0
    %241 = vmatpush2.bf16.msra.mxu0 0
    %242 = vmatprep.subr.bf16.mxu0 0
    %243 = vmatpush2.bf16.msra.mxu0 0
    %244 = vmatprep.subr.bf16.mxu0 0
    %245 = vmatpush2.bf16.msra.mxu0 0
    %246 = vmatprep.subr.bf16.mxu0 0
    %247 = vmatpush2.bf16.msra.mxu0 0
    %248 = vmatprep.subr.bf16.mxu0 0
    %249 = vmatpush2.bf16.msra.mxu0 0
    %250 = vmatprep.subr.bf16.mxu0 0
    %251 = vmatpush2.bf16.msra.mxu0 0
    %252 = vmatprep.mubr.bf16.mxu0 0
    %253 = vmatmul.mubr.bf16.gmra.mxu0 %v165
    %v254 = vpop.f32.mrf.mxu0
    %v255 = vadd.f32 %v170, %v254
    %v256 = vpop.f32.mrf.mxu0
    %v257 = vpop.f32.mrf.mxu0
    %v258 = vadd.f32 %v170, %v257
    %v259 = vpop.f32.mrf.mxu0
    %260 = vdwg.mxu0
    %v261 = vmax.f32 %v255, 0.0
    %v262 = vmax.f32 %v258, 0.0
    %v263 = vld [vmem:[#allocation8] sm:$0xf]
    %v264 = vld [vmem:[#allocation8 + $0x4] sm:$0xf]
    %v265 = vld [vmem:[#allocation8 + $0x8] sm:$0xf]
    %v266 = vld [vmem:[#allocation8 + $0xc] sm:$0xf]
    %v267 = vld [vmem:[#allocation8 + $0x10] sm:$0xf]
    %v268 = vld [vmem:[#allocation8 + $0x14] sm:$0xf]
    %v269 = vld [vmem:[#allocation8 + $0x18] sm:$0xf]
    %v270 = vld [vmem:[#allocation8 + $0x1c] sm:$0xf]
    %v271 = vld [vmem:[#allocation8 + $0x20] sm:$0xf]
    %v272 = vld [vmem:[#allocation8 + $0x24] sm:$0xf]
    %v273 = vld [vmem:[#allocation8 + $0x28] sm:$0xf]
    %v274 = vld [vmem:[#allocation8 + $0x2c] sm:$0xf]
    %v275 = vld [vmem:[#allocation8 + $0x30] sm:$0xf]
    %v276 = vld [vmem:[#allocation8 + $0x34] sm:$0xf]
    %v277 = vld [vmem:[#allocation8 + $0x38] sm:$0xf]
    %v278 = vld [vmem:[#allocation8 + $0x3c] sm:$0xf]
    %v279 = vld [vmem:[%s6] sm:$0x1]
    %v280 = vpack.c.bf16 %v262, %v261
    %v282 = vlaneseq
    %v283 = vshrl.u32 %v282, 7
    %v284 = vsub.s32 0, %v283
    %v285 = vrot.slane %v279, %v284
    %v303 = vunpack.c.l.b16 %v263
    %v304 = vunpack.c.l.b16 %v264
    %v305 = vunpack.c.l.b16 %v265
    %v306 = vunpack.c.l.b16 %v266
    %v307 = vunpack.c.l.b16 %v267
    %v308 = vunpack.c.l.b16 %v268
    %v309 = vunpack.c.l.b16 %v269
    %v310 = vunpack.c.l.b16 %v270
    %v311 = vunpack.c.l.b16 %v271
    %v312 = vunpack.c.l.b16 %v272
    %v313 = vunpack.c.l.b16 %v273
    %v314 = vunpack.c.l.b16 %v274
    %v315 = vunpack.c.l.b16 %v275
    %v316 = vunpack.c.l.b16 %v276
    %v317 = vunpack.c.l.b16 %v277
    %v318 = vunpack.c.l.b16 %v278
    %v319 = vpack.c.b16 %v304, %v303
    %v320 = vpack.c.b16 %v306, %v305
    %v321 = vpack.c.b16 %v308, %v307
    %v322 = vpack.c.b16 %v310, %v309
    %v323 = vpack.c.b16 %v312, %v311
    %v324 = vpack.c.b16 %v314, %v313
    %v325 = vpack.c.b16 %v316, %v315
    %v326 = vpack.c.b16 %v318, %v317
    %335 = vmatprep.subr.bf16.mxu0 0
    %336 = vmatpush1.bf16.msra.mxu0 %v326
    %337 = vmatprep.subr.bf16.mxu0 0
    %338 = vmatpush1.bf16.msra.mxu0 %v325
    %339 = vmatprep.subr.bf16.mxu0 0
    %340 = vmatpush1.bf16.msra.mxu0 %v324
    %341 = vmatprep.subr.bf16.mxu0 0
    %342 = vmatpush1.bf16.msra.mxu0 %v323
    %343 = vmatprep.subr.bf16.mxu0 0
    %344 = vmatpush1.bf16.msra.mxu0 %v322
    %345 = vmatprep.subr.bf16.mxu0 0
    %346 = vmatpush1.bf16.msra.mxu0 %v321
    %347 = vmatprep.subr.bf16.mxu0 0
    %348 = vmatpush1.bf16.msra.mxu0 %v320
    %349 = vmatprep.subr.bf16.mxu0 0
    %350 = vmatpush1.bf16.msra.mxu0 %v319
    %351 = vmatprep.subr.bf16.mxu0 0
    %352 = vmatpush2.bf16.msra.mxu0 0
    %353 = vmatprep.subr.bf16.mxu0 0
    %354 = vmatpush2.bf16.msra.mxu0 0
    %355 = vmatprep.subr.bf16.mxu0 0
    %356 = vmatpush2.bf16.msra.mxu0 0
    %357 = vmatprep.subr.bf16.mxu0 0
    %358 = vmatpush2.bf16.msra.mxu0 0
    %359 = vmatprep.subr.bf16.mxu0 0
    %360 = vmatpush2.bf16.msra.mxu0 0
    %361 = vmatprep.subr.bf16.mxu0 0
    %362 = vmatpush2.bf16.msra.mxu0 0
    %363 = vmatprep.subr.bf16.mxu0 0
    %364 = vmatpush2.bf16.msra.mxu0 0
    %365 = vmatprep.subr.bf16.mxu0 0
    %366 = vmatpush2.bf16.msra.mxu0 0
    %367 = vmatprep.mubr.bf16.mxu0 0
    %368 = vmatmul.mubr.bf16.gmra.mxu0 %v280
    %v369 = vpop.f32.mrf.mxu0
    %v370 = vadd.f32 %v285, %v369
    %v371 = vpop.f32.mrf.mxu0
    %v372 = vpop.f32.mrf.mxu0
    %v373 = vadd.f32 %v285, %v372
    %v374 = vpop.f32.mrf.mxu0
    %375 = vdwg.mxu0
    %376 = vmax.xlane.f32.xlu0 %v370
    %v377 = vpop.xlane.xlu0 %376
    %378 = vmax.xlane.f32.xlu0 %v373
    %v379 = vpop.xlane.xlu0 %378
    %v380 = vsub.f32 %v370, %v377
    %v381 = vsub.f32 %v373, %v379
    %v382 = vmul.f32 %v380, 1.442695
    %v383 = vpow.pop %v382
    %v384 = vmul.f32 %v381, 1.442695
    %v385 = vpow.pop %v384
    %386 = vadd.xlane.f32.xlu0 %v383
    %v387 = vpop.xlane.xlu0 %386
    %388 = vadd.xlane.f32.xlu0 %v385
    %v389 = vpop.xlane.xlu0 %388
    %v390 = vrcp.pop %v387
    %v391 = vmul.f32 %v383, %v390
    %v392 = vrcp.pop %v389
    %v393 = vmul.f32 %v385, %v392
    %394 = vst [vmem:[#allocation10] sm:$0xff] %v391
    %395 = vst [vmem:[#allocation10 + $0x8] sm:$0xff] %v393
    // Predicated region
    $region46: #{tpu_custom_call.1} parent=1 // pred_check
      _
    $region47: #{tpu_custom_call.1} parent=1 // pred_check_branch
      %397 = sbr.rel (0) target = $region49
    $region48: #{tpu_custom_call.1} parent=1 // pred_region
      %s399 = ssub.s32 256, 256
      %400 = vsyncadd [#allocation4], %s399
      %s401 = sshll.u32 [#allocation10], 4
      %s402 = int_to_ptr.vmem [resolvable:$true] %s401
      %407 = dma.vmem_to_hbm [thread:$0]  %s402, 256, %s7, [#allocation4], 128, 128, 8
    $region49: #{tpu_custom_call.1} parent=1 // pred_fallthru
      _
    // Predicated region
    $region50: #{tpu_custom_call.1} parent=1 // pred_check
      _
    $region51: #{tpu_custom_call.1} parent=1 // pred_check_branch
      %409 = sbr.rel (0) target = $region53
    $region52: #{tpu_custom_call.1} parent=1 // pred_region
      %410 = dma.done [#allocation4], 256
    $region53: #{tpu_custom_call.1} parent=1 // pred_fallthru
      _
    %411 = vsyncpa [#allocation3], 1
    %412 = vsyncpa [#allocation6], 1
    %413 = vsyncpa [#allocation9], 1
    %414 = vsyncpa [#allocation4], 1

// kernel: tpu_custom_call.1
$region0: #{tpu_custom_call.1}
  #allocation0 [shape = 'u32[]', space=smem, size = 0x4, offset = 0x4, fixed_abs, tag = 'smem constant byte address 0x4 - core index']
  #allocation1 [shape = 'u32[144,128]{1,0:T(1,128)}', space=vmem, size = 0x12000, scoped, tag = 'internal scratch']
  %s0 = inlined_call_operand.hbm [shape: f32[16,16], index: 0, kind: input, shape index: {}]
  %s1 = inlined_call_operand.hbm [shape: bf16[16,128], index: 1, kind: input, shape index: {}]
  %s2 = inlined_call_operand.vmem [shape: f32[1,128], index: 2, kind: input, shape index: {}]
  %s3 = inlined_call_operand.hbm [shape: bf16[128,128], index: 3, kind: input, shape index: {}]
  %s4 = inlined_call_operand.vmem [shape: f32[1,128], index: 4, kind: input, shape index: {}]
  %s5 = inlined_call_operand.hbm [shape: bf16[128,128], index: 5, kind: input, shape index: {}]
  %s6 = inlined_call_operand.vmem [shape: f32[1,128], index: 6, kind: input, shape index: {}]
  %s7 = inlined_call_operand.hbm [shape: f32[16,128], index: 7, kind: output, shape index: {}]
  %s8 = sld [smem:[#allocation0]]
  $region54: #{tpu_custom_call.1} parent=0
    _
  %s10 = ssub.s32 1, %s8
  %s11 = scalar_select 0, %s10, %s8
  $region1: #{tpu_custom_call.1} parent=0
    #allocation2 [shape = 'u8[8192]{0}', space=vmem, size = 0x2000, scoped, tag = 'input window, operand 0, single buffered']
    #allocation3 [shape = 's32[1]{0}', space=sflag, size = 0x4, scoped, tag = 'scoped memory for tpu_custom_call.1']
    #allocation4 [shape = 's32[1]{0}', space=sflag, size = 0x4, scoped, tag = 'scoped memory for tpu_custom_call.1']
    #allocation5 [shape = 'u8[4096]{0}', space=vmem, size = 0x1000, scoped, tag = 'input window, operand 1, single buffered']
    #allocation6 [shape = 's32[1]{0}', space=sflag, size = 0x4, scoped, tag = 'scoped memory for tpu_custom_call.1']
    #allocation7 [shape = 'u8[32768]{0}', space=vmem, size = 0x8000, scoped, tag = 'input window, operand 3, single buffered']
    #allocation8 [shape = 'u8[32768]{0}', space=vmem, size = 0x8000, scoped, tag = 'input window, operand 5, single buffered']
    #allocation9 [shape = 's32[1]{0}', space=sflag, size = 0x4, scoped, tag = 'scoped memory for tpu_custom_call.1']
    #allocation10 [shape = 'u8[8192]{0}', space=vmem, size = 0x2000, scoped, tag = 'output window, operand 0, single buffered']
    %12 = vsyncpa [#allocation3], 0
    %13 = vsyncpa [#allocation6], 0
    %14 = vsyncpa [#allocation9], 0
    %15 = vsyncpa [#allocation4], 0
    // Predicated region
    $region2: #{tpu_custom_call.1} parent=1 // pred_check
      _
    $region3: #{tpu_custom_call.1} parent=1 // pred_check_branch
      %17 = sbr.rel (0) target = $region5
    $region4: #{tpu_custom_call.1} parent=1 // pred_region
      %s19 = ssub.s32 256, 256
      %20 = vsyncadd [#allocation3], %s19
      %s21 = sshll.u32 [#allocation2], 4
      %s22 = int_to_ptr.vmem [resolvable:$true] %s21
      %27 = dma.hbm_to_vmem [thread:$0]  %s0, 256, %s22, [#allocation3], 128, 128, 8
    $region5: #{tpu_custom_call.1} parent=1 // pred_fallthru
      _
    // Predicated region
    $region6: #{tpu_custom_call.1} parent=1 // pred_check
      _
    $region7: #{tpu_custom_call.1} parent=1 // pred_check_branch
      %29 = sbr.rel (0) target = $region9
    $region8: #{tpu_custom_call.1} parent=1 // pred_region
      %s31 = ssub.s32 128, 128
      %32 = vsyncadd [#allocation6], %s31
      %s33 = sshll.u32 [#allocation5], 4
      %s34 = int_to_ptr.vmem [resolvable:$true] %s33
      %39 = dma.hbm_to_vmem [thread:$0]  %s1, 128, %s34, [#allocation6], 64, 64, 4
    $region9: #{tpu_custom_call.1} parent=1 // pred_fallthru
      _
    // Predicated region
    $region10: #{tpu_custom_call.1} parent=1 // pred_check
      _
    $region11: #{tpu_custom_call.1} parent=1 // pred_check_branch
      %41 = sbr.rel (0) target = $region13
    $region12: #{tpu_custom_call.1} parent=1 // pred_region
      _
    $region13: #{tpu_custom_call.1} parent=1 // pred_fallthru
      _
    // Predicated region
    $region14: #{tpu_custom_call.1} parent=1 // pred_check
      _
    $region15: #{tpu_custom_call.1} parent=1 // pred_check_branch
      %43 = sbr.rel (0) target = $region17
    $region16: #{tpu_custom_call.1} parent=1 // pred_region
      %s45 = ssub.s32 1024, 1024
      %46 = vsyncadd [#allocation6], %s45
      %s47 = sshll.u32 [#allocation7], 4
      %s48 = int_to_ptr.vmem [resolvable:$true] %s47
      %53 = dma.hbm_to_vmem [thread:$0]  %s3, 1024, %s48, [#allocation6], 64, 64, 4
    $region17: #{tpu_custom_call.1} parent=1 // pred_fallthru
      _
    // Predicated region
    $region18: #{tpu_custom_call.1} parent=1 // pred_check
      _
    $region19: #{tpu_custom_call.1} parent=1 // pred_check_branch
      %55 = sbr.rel (0) target = $region21
    $region20: #{tpu_custom_call.1} parent=1 // pred_region
      _
    $region21: #{tpu_custom_call.1} parent=1 // pred_fallthru
      _
    // Predicated region
    $region22: #{tpu_custom_call.1} parent=1 // pred_check
      _
    $region23: #{tpu_custom_call.1} parent=1 // pred_check_branch
      %57 = sbr.rel (0) target = $region25
    $region24: #{tpu_custom_call.1} parent=1 // pred_region
      %s59 = ssub.s32 1024, 1024
      %60 = vsyncadd [#allocation9], %s59
      %s61 = sshll.u32 [#allocation8], 4
      %s62 = int_to_ptr.vmem [resolvable:$true] %s61
      %67 = dma.hbm_to_vmem [thread:$0]  %s5, 1024, %s62, [#allocation9], 64, 64, 4
    $region25: #{tpu_custom_call.1} parent=1 // pred_fallthru
      _
    // Predicated region
    $region26: #{tpu_custom_call.1} parent=1 // pred_check
      _
    $region27: #{tpu_custom_call.1} parent=1 // pred_check_branch
      %69 = sbr.rel (0) target = $region29
    $region28: #{tpu_custom_call.1} parent=1 // pred_region
      _
    $region29: #{tpu_custom_call.1} parent=1 // pred_fallthru
      _
    // Predicated region
    $region30: #{tpu_custom_call.1} parent=1 // pred_check
      _
    $region31: #{tpu_custom_call.1} parent=1 // pred_check_branch
      %71 = sbr.rel (0) target = $region33
    $region32: #{tpu_custom_call.1} parent=1 // pred_region
      %72 = dma.done [#allocation3], 256
    $region33: #{tpu_custom_call.1} parent=1 // pred_fallthru
      _
    // Predicated region
    $region34: #{tpu_custom_call.1} parent=1 // pred_check
      _
    $region35: #{tpu_custom_call.1} parent=1 // pred_check_branch
      %74 = sbr.rel (0) target = $region37
    $region36: #{tpu_custom_call.1} parent=1 // pred_region
      %75 = dma.done [#allocation6], 128
    $region37: #{tpu_custom_call.1} parent=1 // pred_fallthru
      _
    // Predicated region
    $region38: #{tpu_custom_call.1} parent=1 // pred_check
      _
    $region39: #{tpu_custom_call.1} parent=1 // pred_check_branch
      %77 = sbr.rel (0) target = $region41
    $region40: #{tpu_custom_call.1} parent=1 // pred_region
      %78 = dma.done [#allocation6], 1024
    $region41: #{tpu_custom_call.1} parent=1 // pred_fallthru
      _
    // Predicated region
    $region42: #{tpu_custom_call.1} parent=1 // pred_check
      _
    $region43: #{tpu_custom_call.1} parent=1 // pred_check_branch
      %80 = sbr.rel (0) target = $region45
    $region44: #{tpu_custom_call.1} parent=1 // pred_region
      %81 = dma.done [#allocation9], 1024
    $region45: #{tpu_custom_call.1} parent=1 // pred_fallthru
      _
    %v83 = vld [vmem:[#allocation2] sm:$0xff]
    %v84 = vld [vmem:[#allocation2 + $0x8] sm:$0xff]
    %v85 = vld [vmem:[#allocation5] sm:$0xf]
    %v86 = vld [vmem:[#allocation5 + $0x4] sm:$0xf]
    %v87 = vld [vmem:[%s2] sm:$0x1]
    %v88 = vpack.c.bf16 %v84, %v83
    %v90 = vlaneseq
    %v91 = vshrl.u32 %v90, 7
    %v92 = vsub.s32 0, %v91
    %v93 = vrot.slane %v87, %v92
    %v97 = vunpack.c.l.b16 %v85
    %v98 = vunpack.c.l.b16 %v86
    %v99 = vpack.c.b16 %v98, %v97
    %vm101 = vcmask 130048
    %v103 = vsel %vm101, %v88, 0
    %105 = vmatprep.subr.bf16.mxu0 0
    %106 = vmatpush1.bf16.msra.mxu0 0
    %107 = vmatprep.subr.bf16.mxu0 0
    %108 = vmatpush1.bf16.msra.mxu0 0
    %109 = vmatprep.subr.bf16.mxu0 0
    %110 = vmatpush1.bf16.msra.mxu0 0
    %111 = vmatprep.subr.bf16.mxu0 0
    %112 = vmatpush1.bf16.msra.mxu0 0
    %113 = vmatprep.subr.bf16.mxu0 0
    %114 = vmatpush1.bf16.msra.mxu0 0
    %115 = vmatprep.subr.bf16.mxu0 0
    %116 = vmatpush1.bf16.msra.mxu0 0
    %117 = vmatprep.subr.bf16.mxu0 0
    %118 = vmatpush1.bf16.msra.mxu0 0
    %119 = vmatprep.subr.bf16.mxu0 0
    %120 = vmatpush1.bf16.msra.mxu0 %v99
    %121 = vmatprep.subr.bf16.mxu0 0
    %122 = vmatpush2.bf16.msra.mxu0 0
    %123 = vmatprep.subr.bf16.mxu0 0
    %124 = vmatpush2.bf16.msra.mxu0 0
    %125 = vmatprep.subr.bf16.mxu0 0
    %126 = vmatpush2.bf16.msra.mxu0 0
    %127 = vmatprep.subr.bf16.mxu0 0
    %128 = vmatpush2.bf16.msra.mxu0 0
    %129 = vmatprep.subr.bf16.mxu0 0
    %130 = vmatpush2.bf16.msra.mxu0 0
    %131 = vmatprep.subr.bf16.mxu0 0
    %132 = vmatpush2.bf16.msra.mxu0 0
    %133 = vmatprep.subr.bf16.mxu0 0
    %134 = vmatpush2.bf16.msra.mxu0 0
    %135 = vmatprep.subr.bf16.mxu0 0
    %136 = vmatpush2.bf16.msra.mxu0 0
    %137 = vmatprep.mubr.bf16.mxu0 0
    %138 = vmatmul.mubr.bf16.gmra.mxu0 %v103
    %v139 = vpop.f32.mrf.mxu0
    %v140 = vadd.f32 %v93, %v139
    %v141 = vpop.f32.mrf.mxu0
    %v142 = vpop.f32.mrf.mxu0
    %v143 = vadd.f32 %v93, %v142
    %v144 = vpop.f32.mrf.mxu0
    %145 = vdwg.mxu0
    %v146 = vmax.f32 %v140, 0.0
    %v147 = vmax.f32 %v143, 0.0
    %v148 = vld [vmem:[#allocation7] sm:$0xf]
    %v149 = vld [vmem:[#allocation7 + $0x4] sm:$0xf]
    %v150 = vld [vmem:[#allocation7 + $0x8] sm:$0xf]
    %v151 = vld [vmem:[#allocation7 + $0xc] sm:$0xf]
    %v152 = vld [vmem:[#allocation7 + $0x10] sm:$0xf]
    %v153 = vld [vmem:[#allocation7 + $0x14] sm:$0xf]
    %v154 = vld [vmem:[#allocation7 + $0x18] sm:$0xf]
    %v155 = vld [vmem:[#allocation7 + $0x1c] sm:$0xf]
    %v156 = vld [vmem:[#allocation7 + $0x20] sm:$0xf]
    %v157 = vld [vmem:[#allocation7 + $0x24] sm:$0xf]
    %v158 = vld [vmem:[#allocation7 + $0x28] sm:$0xf]
    %v159 = vld [vmem:[#allocation7 + $0x2c] sm:$0xf]
    %v160 = vld [vmem:[#allocation7 + $0x30] sm:$0xf]
    %v161 = vld [vmem:[#allocation7 + $0x34] sm:$0xf]
    %v162 = vld [vmem:[#allocation7 + $0x38] sm:$0xf]
    %v163 = vld [vmem:[#allocation7 + $0x3c] sm:$0xf]
    %v164 = vld [vmem:[%s4] sm:$0x1]
    %v165 = vpack.c.bf16 %v147, %v146
    %v167 = vlaneseq
    %v168 = vshrl.u32 %v167, 7
    %v169 = vsub.s32 0, %v168
    %v170 = vrot.slane %v164, %v169
    %v188 = vunpack.c.l.b16 %v148
    %v189 = vunpack.c.l.b16 %v149
    %v190 = vunpack.c.l.b16 %v150
    %v191 = vunpack.c.l.b16 %v151
    %v192 = vunpack.c.l.b16 %v152
    %v193 = vunpack.c.l.b16 %v153
    %v194 = vunpack.c.l.b16 %v154
    %v195 = vunpack.c.l.b16 %v155
    %v196 = vunpack.c.l.b16 %v156
    %v197 = vunpack.c.l.b16 %v157
    %v198 = vunpack.c.l.b16 %v158
    %v199 = vunpack.c.l.b16 %v159
    %v200 = vunpack.c.l.b16 %v160
    %v201 = vunpack.c.l.b16 %v161
    %v202 = vunpack.c.l.b16 %v162
    %v203 = vunpack.c.l.b16 %v163
    %v204 = vpack.c.b16 %v189, %v188
    %v205 = vpack.c.b16 %v191, %v190
    %v206 = vpack.c.b16 %v193, %v192
    %v207 = vpack.c.b16 %v195, %v194
    %v208 = vpack.c.b16 %v197, %v196
    %v209 = vpack.c.b16 %v199, %v198
    %v210 = vpack.c.b16 %v201, %v200
    %v211 = vpack.c.b16 %v203, %v202
    %220 = vmatprep.subr.bf16.mxu0 0
    %221 = vmatpush1.bf16.msra.mxu0 %v211
    %222 = vmatprep.subr.bf16.mxu0 0
    %223 = vmatpush1.bf16.msra.mxu0 %v210
    %224 = vmatprep.subr.bf16.mxu0 0
    %225 = vmatpush1.bf16.msra.mxu0 %v209
    %226 = vmatprep.subr.bf16.mxu0 0
    %227 = vmatpush1.bf16.msra.mxu0 %v208
    %228 = vmatprep.subr.bf16.mxu0 0
    %229 = vmatpush1.bf16.msra.mxu0 %v207
    %230 = vmatprep.subr.bf16.mxu0 0
    %231 = vmatpush1.bf16.msra.mxu0 %v206
    %232 = vmatprep.subr.bf16.mxu0 0
    %233 = vmatpush1.bf16.msra.mxu0 %v205
    %234 = vmatprep.subr.bf16.mxu0 0
    %235 = vmatpush1.bf16.msra.mxu0 %v204
    %236 = vmatprep.subr.bf16.mxu0 0
    %237 = vmatpush2.bf16.msra.mxu0 0
    %238 = vmatprep.subr.bf16.mxu0 0
    %239 = vmatpush2.bf16.msra.mxu0 0
    %240 = vmatprep.subr.bf16.mxu0 0
    %241 = vmatpush2.bf16.msra.mxu0 0
    %242 = vmatprep.subr.bf16.mxu0 0
    %243 = vmatpush2.bf16.msra.mxu0 0
    %244 = vmatprep.subr.bf16.mxu0 0
    %245 = vmatpush2.bf16.msra.mxu0 0
    %246 = vmatprep.subr.bf16.mxu0 0
    %247 = vmatpush2.bf16.msra.mxu0 0
    %248 = vmatprep.subr.bf16.mxu0 0
    %249 = vmatpush2.bf16.msra.mxu0 0
    %250 = vmatprep.subr.bf16.mxu0 0
    %251 = vmatpush2.bf16.msra.mxu0 0
    %252 = vmatprep.mubr.bf16.mxu0 0
    %253 = vmatmul.mubr.bf16.gmra.mxu0 %v165
    %v254 = vpop.f32.mrf.mxu0
    %v255 = vadd.f32 %v170, %v254
    %v256 = vpop.f32.mrf.mxu0
    %v257 = vpop.f32.mrf.mxu0
    %v258 = vadd.f32 %v170, %v257
    %v259 = vpop.f32.mrf.mxu0
    %260 = vdwg.mxu0
    %v261 = vmax.f32 %v255, 0.0
    %v262 = vmax.f32 %v258, 0.0
    %v263 = vld [vmem:[#allocation8] sm:$0xf]
    %v264 = vld [vmem:[#allocation8 + $0x4] sm:$0xf]
    %v265 = vld [vmem:[#allocation8 + $0x8] sm:$0xf]
    %v266 = vld [vmem:[#allocation8 + $0xc] sm:$0xf]
    %v267 = vld [vmem:[#allocation8 + $0x10] sm:$0xf]
    %v268 = vld [vmem:[#allocation8 + $0x14] sm:$0xf]
    %v269 = vld [vmem:[#allocation8 + $0x18] sm:$0xf]
    %v270 = vld [vmem:[#allocation8 + $0x1c] sm:$0xf]
    %v271 = vld [vmem:[#allocation8 + $0x20] sm:$0xf]
    %v272 = vld [vmem:[#allocation8 + $0x24] sm:$0xf]
    %v273 = vld [vmem:[#allocation8 + $0x28] sm:$0xf]
    %v274 = vld [vmem:[#allocation8 + $0x2c] sm:$0xf]
    %v275 = vld [vmem:[#allocation8 + $0x30] sm:$0xf]
    %v276 = vld [vmem:[#allocation8 + $0x34] sm:$0xf]
    %v277 = vld [vmem:[#allocation8 + $0x38] sm:$0xf]
    %v278 = vld [vmem:[#allocation8 + $0x3c] sm:$0xf]
    %v279 = vld [vmem:[%s6] sm:$0x1]
    %v280 = vpack.c.bf16 %v262, %v261
    %v282 = vlaneseq
    %v283 = vshrl.u32 %v282, 7
    %v284 = vsub.s32 0, %v283
    %v285 = vrot.slane %v279, %v284
    %v303 = vunpack.c.l.b16 %v263
    %v304 = vunpack.c.l.b16 %v264
    %v305 = vunpack.c.l.b16 %v265
    %v306 = vunpack.c.l.b16 %v266
    %v307 = vunpack.c.l.b16 %v267
    %v308 = vunpack.c.l.b16 %v268
    %v309 = vunpack.c.l.b16 %v269
    %v310 = vunpack.c.l.b16 %v270
    %v311 = vunpack.c.l.b16 %v271
    %v312 = vunpack.c.l.b16 %v272
    %v313 = vunpack.c.l.b16 %v273
    %v314 = vunpack.c.l.b16 %v274
    %v315 = vunpack.c.l.b16 %v275
    %v316 = vunpack.c.l.b16 %v276
    %v317 = vunpack.c.l.b16 %v277
    %v318 = vunpack.c.l.b16 %v278
    %v319 = vpack.c.b16 %v304, %v303
    %v320 = vpack.c.b16 %v306, %v305
    %v321 = vpack.c.b16 %v308, %v307
    %v322 = vpack.c.b16 %v310, %v309
    %v323 = vpack.c.b16 %v312, %v311
    %v324 = vpack.c.b16 %v314, %v313
    %v325 = vpack.c.b16 %v316, %v315
    %v326 = vpack.c.b16 %v318, %v317
    %335 = vmatprep.subr.bf16.mxu0 0
    %336 = vmatpush1.bf16.msra.mxu0 %v326
    %337 = vmatprep.subr.bf16.mxu0 0
    %338 = vmatpush1.bf16.msra.mxu0 %v325
    %339 = vmatprep.subr.bf16.mxu0 0
    %340 = vmatpush1.bf16.msra.mxu0 %v324
    %341 = vmatprep.subr.bf16.mxu0 0
    %342 = vmatpush1.bf16.msra.mxu0 %v323
    %343 = vmatprep.subr.bf16.mxu0 0
    %344 = vmatpush1.bf16.msra.mxu0 %v322
    %345 = vmatprep.subr.bf16.mxu0 0
    %346 = vmatpush1.bf16.msra.mxu0 %v321
    %347 = vmatprep.subr.bf16.mxu0 0
    %348 = vmatpush1.bf16.msra.mxu0 %v320
    %349 = vmatprep.subr.bf16.mxu0 0
    %350 = vmatpush1.bf16.msra.mxu0 %v319
    %351 = vmatprep.subr.bf16.mxu0 0
    %352 = vmatpush2.bf16.msra.mxu0 0
    %353 = vmatprep.subr.bf16.mxu0 0
    %354 = vmatpush2.bf16.msra.mxu0 0
    %355 = vmatprep.subr.bf16.mxu0 0
    %356 = vmatpush2.bf16.msra.mxu0 0
    %357 = vmatprep.subr.bf16.mxu0 0
    %358 = vmatpush2.bf16.msra.mxu0 0
    %359 = vmatprep.subr.bf16.mxu0 0
    %360 = vmatpush2.bf16.msra.mxu0 0
    %361 = vmatprep.subr.bf16.mxu0 0
    %362 = vmatpush2.bf16.msra.mxu0 0
    %363 = vmatprep.subr.bf16.mxu0 0
    %364 = vmatpush2.bf16.msra.mxu0 0
    %365 = vmatprep.subr.bf16.mxu0 0
    %366 = vmatpush2.bf16.msra.mxu0 0
    %367 = vmatprep.mubr.bf16.mxu0 0
    %368 = vmatmul.mubr.bf16.gmra.mxu0 %v280
    %v369 = vpop.f32.mrf.mxu0
    %v370 = vadd.f32 %v285, %v369
    %v371 = vpop.f32.mrf.mxu0
    %v372 = vpop.f32.mrf.mxu0
    %v373 = vadd.f32 %v285, %v372
    %v374 = vpop.f32.mrf.mxu0
    %375 = vdwg.mxu0
    %376 = vmax.xlane.f32.xlu0 %v370
    %v377 = vpop.xlane.xlu0 %376
    %378 = vmax.xlane.f32.xlu0 %v373
    %v379 = vpop.xlane.xlu0 %378
    %v380 = vsub.f32 %v370, %v377
    %v381 = vsub.f32 %v373, %v379
    %v382 = vmul.f32 %v380, 1.442695
    %v383 = vpow.pop %v382
    %v384 = vmul.f32 %v381, 1.442695
    %v385 = vpow.pop %v384
    %386 = vadd.xlane.f32.xlu0 %v383
    %v387 = vpop.xlane.xlu0 %386
    %388 = vadd.xlane.f32.xlu0 %v385
    %v389 = vpop.xlane.xlu0 %388
    %v390 = vrcp.pop %v387
    %v391 = vmul.f32 %v383, %v390
    %v392 = vrcp.pop %v389
    %v393 = vmul.f32 %v385, %v392
    %394 = vst [vmem:[#allocation10] sm:$0xff] %v391
    %395 = vst [vmem:[#allocation10 + $0x8] sm:$0xff] %v393
    // Predicated region
    $region46: #{tpu_custom_call.1} parent=1 // pred_check
      _
    $region47: #{tpu_custom_call.1} parent=1 // pred_check_branch
      %397 = sbr.rel (0) target = $region49
    $region48: #{tpu_custom_call.1} parent=1 // pred_region
      %s399 = ssub.s32 256, 256
      %400 = vsyncadd [#allocation4], %s399
      %s401 = sshll.u32 [#allocation10], 4
      %s402 = int_to_ptr.vmem [resolvable:$true] %s401
      %407 = dma.vmem_to_hbm [thread:$0]  %s402, 256, %s7, [#allocation4], 128, 128, 8
    $region49: #{tpu_custom_call.1} parent=1 // pred_fallthru
      _
    // Predicated region
    $region50: #{tpu_custom_call.1} parent=1 // pred_check
      _
    $region51: #{tpu_custom_call.1} parent=1 // pred_check_branch
      %409 = sbr.rel (0) target = $region53
    $region52: #{tpu_custom_call.1} parent=1 // pred_region
      %410 = dma.done [#allocation4], 256
    $region53: #{tpu_custom_call.1} parent=1 // pred_fallthru
      _
    %411 = vsyncpa [#allocation3], 1
    %412 = vsyncpa [#allocation6], 1
    %413 = vsyncpa [#allocation9], 1
    %414 = vsyncpa [#allocation4], 1

</llo_original>
